<compile_context>
chip_gen: v6e
topology: v6e:2x2x1
jax: 0.10.0
libtpu: 0.0.40
codegen_flags: <defaults>
</compile_context>

<pallas_src>
import numpy as np
import jax
import jax.numpy as jnp
from jax.experimental import pallas as pl
from jax.experimental.pallas import tpu as pltpu


# ------------------------------ kernels ------------------------------------


def _gather_kernel(idx_ref, x_ref, o_ref):
    # out[b, j] = x[b, idx[j]]  -- pure data movement, no MXU.
    x = x_ref[...]                                    # [TB, F]
    idx = jnp.broadcast_to(idx_ref[...], x.shape)     # [TB, F] int32
    o_ref[...] = jnp.take_along_axis(x, idx, axis=1)


def _onehot_matmul_kernel(x_ref, pmat_ref, o_ref):
    # Fallback path: out = x @ P with P[p[j], j] = 1.
    # Exact for float inputs: every product is x*1.0 or x*0.0, f32 accumulate.
    pmat = pmat_ref[...].astype(x_ref.dtype)          # bf16 0/1 -> exact upcast
    o_ref[...] = jnp.dot(
        x_ref[...], pmat, preferred_element_type=jnp.float32
    ).astype(o_ref.dtype)


# ------------------------------ wrappers ------------------------------------


def _batch_tile(batch, block_batch):
    if batch <= block_batch:
        return batch                      # full dim: always a legal block
    # Partial tiles must keep the sublane axis a multiple of 8.
    return max(8, (block_batch // 8) * 8)


def _permute_gather(x, idx_row, block_batch):
    B, F = x.shape
    tb = _batch_tile(B, block_batch)
    return pl.pallas_call(
        _gather_kernel,
        out_shape=jax.ShapeDtypeStruct((B, F), x.dtype),
        grid=(pl.cdiv(B, tb),),
        in_specs=[
            pl.BlockSpec((1, F), lambda i: (0, 0)),    # resident index row
            pl.BlockSpec((tb, F), lambda i: (i, 0)),
        ],
        out_specs=pl.BlockSpec((tb, F), lambda i: (i, 0)),
        compiler_params=pltpu.CompilerParams(
            dimension_semantics=("parallel",)),
        cost_estimate=pl.CostEstimate(
            flops=0,
            transcendentals=0,
            bytes_accessed=int(2 * B * F * x.dtype.itemsize + F * 4)),
    )(idx_row, x)


def _permute_matmul(x, p, block_batch):
    B, F = x.shape
    tb = _batch_tile(B, block_batch)
    # One-hot permutation matrix built with numpy at trace time (no per-call
    # device scatter); bf16 is exact for 0/1 values and halves its footprint.
    pmat_np = np.zeros((F, F), dtype=np.float32)
    pmat_np[p, np.arange(F)] = 1.0
    pmat = jnp.asarray(pmat_np, dtype=jnp.bfloat16)
    return pl.pallas_call(
        _onehot_matmul_kernel,
        out_shape=jax.ShapeDtypeStruct((B, F), x.dtype),
        grid=(pl.cdiv(B, tb),),
        in_specs=[
            pl.BlockSpec((tb, F), lambda i: (i, 0)),
            pl.BlockSpec((F, F), lambda i: (0, 0)),    # resident P matrix
        ],
        out_specs=pl.BlockSpec((tb, F), lambda i: (i, 0)),
        compiler_params=pltpu.CompilerParams(
            dimension_semantics=("parallel",)),
        cost_estimate=pl.CostEstimate(
            flops=2 * B * F * F,
            transcendentals=0,
            bytes_accessed=int(2 * B * F * x.dtype.itemsize + F * F * 2)),
    )(x, pmat)


def permutation_forward(x: jax.Array, p, *, block_batch: int = 512) -> jax.Array:
    """Pallas equivalent of Permutation.forward: returns x[:, p]."""
    B, F = x.shape
    p = np.asarray(p)
    assert p.shape == (F,)
    # Static permutation indices as a (1, F) int32 row (VMEM-resident input).
    idx_row = jnp.asarray(p.reshape(1, F), dtype=jnp.int32)
    try:
        return _permute_gather(x, idx_row, block_batch)
    except Exception:
        # Lane dynamic-gather not supported by this TPU/jax combination;
        # fall back to the exact one-hot MXU matmul formulation.
        return _permute_matmul(x, p, block_batch)


if __name__ == "__main__":
    # Deterministic module parameters (as in Permutation.__init__).
    in_features = 128          # multiple of 128 -> lane-dense, unmasked stores
    batch = 16
    p = np.random.RandomState(0).permutation(in_features)

    # Deterministic example input.
    x = jax.random.normal(jax.random.PRNGKey(0), (batch, in_features),
                          dtype=jnp.float32)

    # block_batch=8 keeps tiles tiny at demo shapes but still exercises the
    # batch-tiled, parallel grid (grid=(2,)); real sizes use the 512 default.
    out = permutation_forward(x, p, block_batch=8)
    out = jax.block_until_ready(out)

    # Reference: PyTorch forward is inputs[:, p].  Result must be bit-exact.
    ref = np.asarray(x)[:, p]
    np.testing.assert_allclose(np.asarray(out), ref, rtol=0, atol=0)

    print("KERNEL_OK")
</pallas_src>

<mosaic_0001>
module attributes {stable_mosaic.version = 11 : i64} {
  func.func @_gather_kernel(%arg0: i32, %arg1: memref<1x128xi32, #tpu.memory_space<vmem>>, %arg2: memref<8x128xf32, #tpu.memory_space<vmem>>, %arg3: memref<8x128xf32, #tpu.memory_space<vmem>>) attributes {dimension_semantics = [#tpu.dimension_semantics<parallel>], iteration_bounds = array<i64: 2>, scalar_prefetch = 0 : i64, scratch_operands = 0 : i64, tpu.core_type = #tpu.core_type<tc>, window_params = [{pipeline_mode = #tpu.pipeline_mode<synchronous>, transform_indices = @transform_0, window_bounds = array<i64: 1, 128>}, {transform_indices = @transform_1, window_bounds = array<i64: 8, 128>}, {transform_indices = @transform_2, window_bounds = array<i64: 8, 128>}]} {
    %c0 = arith.constant 0 : index
    %c0_0 = arith.constant 0 : index
    %0 = vector.load %arg2[%c0, %c0_0] : memref<8x128xf32, #tpu.memory_space<vmem>>, vector<8x128xf32>
    %c0_1 = arith.constant 0 : index
    %c0_2 = arith.constant 0 : index
    %1 = vector.load %arg1[%c0_1, %c0_2] : memref<1x128xi32, #tpu.memory_space<vmem>>, vector<1x128xi32>
    %2 = vector.shape_cast %1 : vector<1x128xi32> to vector<1x128xi32>
    %3 = vector.broadcast %2 : vector<1x128xi32> to vector<8x128xi32>
    %c0_i32 = arith.constant 0 : i32
    %4 = vector.broadcast %c0_i32 : i32 to vector<8x128xi32>
    %5 = arith.cmpi slt, %3, %4 : vector<8x128xi32>
    %c128_i32 = arith.constant 128 : i32
    %6 = vector.broadcast %c128_i32 : i32 to vector<8x128xi32>
    %7 = arith.addi %3, %6 : vector<8x128xi32>
    %8 = arith.select %5, %7, %3 : vector<8x128xi1>, vector<8x128xi32>
    %9 = vector.shape_cast %8 : vector<8x128xi32> to vector<8x128x1xi32>
    %10 = vector.shape_cast %9 : vector<8x128x1xi32> to vector<8x128xi32>
    %11 = tpu.dynamic_gather %0[%10] in [1] : vector<8x128xf32>, vector<8x128xi32> -> vector<8x128xf32>
    %c0_3 = arith.constant 0 : index
    %c0_4 = arith.constant 0 : index
    %12 = vector.load %arg3[%c0_3, %c0_4] : memref<8x128xf32, #tpu.memory_space<vmem>>, vector<8x128xf32>
    tpu.vector_store %arg3[%c0_3, %c0_4], %11 {strides = array<i32>} : memref<8x128xf32, #tpu.memory_space<vmem>>, vector<8x128xf32>,
    return
  }
  func.func @transform_0(%arg0: i32) -> (i32, i32) {
    %c0_i32 = arith.constant 0 : i32
    %c0_i32_0 = arith.constant 0 : i32
    %c0_i32_1 = arith.constant 0 : i32
    return %c0_i32, %c0_i32_0 : i32, i32
  }
  func.func @transform_1(%arg0: i32) -> (i32, i32) {
    %c0_i32 = arith.constant 0 : i32
    %c0_i32_0 = arith.constant 0 : i32
    return %arg0, %c0_i32 : i32, i32
  }
  func.func @transform_2(%arg0: i32) -> (i32, i32) {
    %c0_i32 = arith.constant 0 : i32
    %c0_i32_0 = arith.constant 0 : i32
    return %arg0, %c0_i32 : i32, i32
  }
}

module attributes {stable_mosaic.version = 11 : i64} {
  func.func @_onehot_matmul_kernel(%arg0: i32, %arg1: memref<8x128xf32, #tpu.memory_space<vmem>>, %arg2: memref<128x128xbf16, #tpu.memory_space<vmem>>, %arg3: memref<8x128xf32, #tpu.memory_space<vmem>>) attributes {dimension_semantics = [#tpu.dimension_semantics<parallel>], iteration_bounds = array<i64: 2>, scalar_prefetch = 0 : i64, scratch_operands = 0 : i64, tpu.core_type = #tpu.core_type<tc>, window_params = [{transform_indices = @transform_0, window_bounds = array<i64: 8, 128>}, {pipeline_mode = #tpu.pipeline_mode<synchronous>, transform_indices = @transform_1, window_bounds = array<i64: 128, 128>}, {transform_indices = @transform_2, window_bounds = array<i64: 8, 128>}]} {
    %c0 = arith.constant 0 : index
    %c0_0 = arith.constant 0 : index
    %0 = vector.load %arg2[%c0, %c0_0] : memref<128x128xbf16, #tpu.memory_space<vmem>>, vector<128x128xbf16>
    %1 = arith.extf %0 : vector<128x128xbf16> to vector<128x128xf32>
    %c0_1 = arith.constant 0 : index
    %c0_2 = arith.constant 0 : index
    %2 = vector.load %arg1[%c0_1, %c0_2] : memref<8x128xf32, #tpu.memory_space<vmem>>, vector<8x128xf32>
    %cst = arith.constant dense<0.000000e+00> : vector<8x128xf32>
    %3 = tpu.matmul %2, %1, %cst {dimension_numbers = #tpu.dot_dimension_numbers<[1], [0], [0], [1], [0, 0, 1, 1], [], []>} : vector<8x128xf32>, vector<128x128xf32>, vector<8x128xf32> -> vector<8x128xf32>
    %c0_3 = arith.constant 0 : index
    %c0_4 = arith.constant 0 : index
    %4 = vector.load %arg3[%c0_3, %c0_4] : memref<8x128xf32, #tpu.memory_space<vmem>>, vector<8x128xf32>
    tpu.vector_store %arg3[%c0_3, %c0_4], %3 {strides = array<i32>} : memref<8x128xf32, #tpu.memory_space<vmem>>, vector<8x128xf32>,
    return
  }
  func.func @transform_0(%arg0: i32) -> (i32, i32) {
    %c0_i32 = arith.constant 0 : i32
    %c0_i32_0 = arith.constant 0 : i32
    return %arg0, %c0_i32 : i32, i32
  }
  func.func @transform_1(%arg0: i32) -> (i32, i32) {
    %c0_i32 = arith.constant 0 : i32
    %c0_i32_0 = arith.constant 0 : i32
    %c0_i32_1 = arith.constant 0 : i32
    return %c0_i32, %c0_i32_0 : i32, i32
  }
  func.func @transform_2(%arg0: i32) -> (i32, i32) {
    %c0_i32 = arith.constant 0 : i32
    %c0_i32_0 = arith.constant 0 : i32
    return %arg0, %c0_i32 : i32, i32
  }
}

</mosaic_0001>

<llo_original>
// kernel: tpu_custom_call.1
$region0: #{tpu_custom_call.1}
  #allocation0 [shape = 'u32[]', space=smem, size = 0x4, offset = 0x4, fixed_abs, tag = 'smem constant byte address 0x4 - core index']
  #allocation1 [shape = 'u32[144,128]{1,0:T(1,128)}', space=vmem, size = 0x12000, scoped, tag = 'internal scratch']
  %s0 = inlined_call_operand.hbm [shape: s32[1,128], index: 0, kind: input, shape index: {}]
  %s1 = inlined_call_operand.hbm [shape: f32[16,128], index: 1, kind: input, shape index: {}]
  %s2 = inlined_call_operand.hbm [shape: f32[16,128], index: 2, kind: output, shape index: {}]
  %s3 = sld [smem:[#allocation0]]
  $region49: #{tpu_custom_call.1} parent=0
    _
  %s5 = ssub.s32 1, %s3
  %s6 = scalar_select 0, %s5, %s3
  $region1: #{tpu_custom_call.1} parent=0
    #allocation2 [shape = 'u8[512]{0}', space=vmem, size = 0x400, scoped, tag = 'input window, operand 0, single buffered']
    #allocation3 [shape = 's32[2]{0}', space=sflag, size = 0x8, scoped, tag = 'scoped memory for tpu_custom_call.1']
    #allocation4 [shape = 's32[2]{0}', space=sflag, size = 0x8, scoped, tag = 'scoped memory for tpu_custom_call.1']
    #allocation5 [shape = 'u8[8192]{0}', space=vmem, size = 0x2000, scoped, tag = 'input window, operand 1']
    #allocation6 [shape = 's32[2]{0}', space=sflag, size = 0x8, scoped, tag = 'scoped memory for tpu_custom_call.1']
    #allocation7 [shape = 'u8[8192]{0}', space=vmem, size = 0x2000, scoped, tag = 'output window, operand 0']
    %7 = vsyncpa [#allocation3], 0
    %8 = vsyncpa [#allocation6], 0
    %s9 = scalar_lea.sflag [#allocation6], 1
    %10 = vsyncpa %s9, 0
    %11 = vsyncpa [#allocation4], 0
    %s12 = scalar_lea.sflag [#allocation4], 1
    %13 = vsyncpa %s12, 0
    loop: start=0, step=1, limit=4
    $region2: #{tpu_custom_call.1} parent=1 // loop_pre_header
      _
    $region3: #{tpu_custom_call.1} parent=1 // loop_header
      %s15 = sphi 0, %s19
      %p16 = scmp.ge.s32.totalorder %s15, 4
      %s23 = sphi 0, %s23
      %s25 = sphi 0, %s23
      %s26 = sphi 0, %s25
      %s40 = sphi 0, %s26
      %s46 = sphi 0, %s48
      %s49 = sphi 0, %s46
      %s50 = sphi 0, %s49
      %s66 = sphi 0, %s50
      %s72 = sphi 0, %s74
      %s75 = sphi 0, %s72
      %s76 = sphi 0, %s75
      %s92 = sphi 0, %s76
    $region4: #{tpu_custom_call.1} parent=1 // loop_header_branch
      %18 = sbr.rel (%p16) target = $region8
    $region5: #{tpu_custom_call.1} parent=1 // loop_body
      %s20 = ssub.s32 %s15, 1
      %s21 = ssub.s32 %s15, 2
      %s22 = sadd.s32 %s15, 1
      %s24 = sadd.s32 %s23, 1
      %p27 = scmp.eq.s32.totalorder %s15, 1
      %p28 = scmp.ne.s32.totalorder %s23, %s25
      %p29 = scmp.eq.s32.totalorder %s15, 0
      %p30 = por %p28, %p29
      %p31 = scmp.ne.s32.totalorder %s23, %s25
      %p32 = scmp.eq.s32.totalorder %s20, 1
      %p33 = por %p31, %p32
      %p34 = scmp.ne.s32.totalorder %s25, %s26
      %p35 = scmp.eq.s32.totalorder %s20, 0
      %p36 = por %p34, %p35
      %p37 = scmp.ne.s32.totalorder %s25, %s26
      %p38 = scmp.eq.s32.totalorder %s21, 1
      %p39 = por %p37, %p38
      %p41 = scmp.ne.s32.totalorder %s26, %s40
      %p42 = scmp.eq.s32.totalorder %s21, 0
      %p43 = por %p41, %p42
      %s44 = ssub.s32 %s15, %s22
      %p45 = scmp.eq.s32.totalorder %s44, 0
      %s47 = sadd.s32 %s46, 1
      %s48 = scalar_select %p45, %s46, %s47
      %p51 = pneg %p45
      %p52 = scmp.eq.s32.totalorder %s15, 1
      %p53 = por %p51, %p52
      %p54 = scmp.ne.s32.totalorder %s46, %s49
      %p55 = scmp.eq.s32.totalorder %s15, 0
      %p56 = por %p54, %p55
      %p57 = scmp.ne.s32.totalorder %s46, %s49
      %p58 = scmp.eq.s32.totalorder %s20, 1
      %p59 = por %p57, %p58
      %p60 = scmp.ne.s32.totalorder %s49, %s50
      %p61 = scmp.eq.s32.totalorder %s20, 0
      %p62 = por %p60, %p61
      %p63 = scmp.ne.s32.totalorder %s49, %s50
      %p64 = scmp.eq.s32.totalorder %s21, 1
      %p65 = por %p63, %p64
      %p67 = scmp.ne.s32.totalorder %s50, %s66
      %p68 = scmp.eq.s32.totalorder %s21, 0
      %p69 = por %p67, %p68
      %s70 = ssub.s32 %s15, %s22
      %p71 = scmp.eq.s32.totalorder %s70, 0
      %s73 = sadd.s32 %s72, 1
      %s74 = scalar_select %p71, %s72, %s73
      %p77 = pneg %p71
      %p78 = scmp.eq.s32.totalorder %s15, 1
      %p79 = por %p77, %p78
      %p80 = scmp.ne.s32.totalorder %s72, %s75
      %p81 = scmp.eq.s32.totalorder %s15, 0
      %p82 = por %p80, %p81
      %p83 = scmp.ne.s32.totalorder %s72, %s75
      %p84 = scmp.eq.s32.totalorder %s20, 1
      %p85 = por %p83, %p84
      %p86 = scmp.ne.s32.totalorder %s75, %s76
      %p87 = scmp.eq.s32.totalorder %s20, 0
      %p88 = por %p86, %p87
      %p89 = scmp.ne.s32.totalorder %s75, %s76
      %p90 = scmp.eq.s32.totalorder %s21, 1
      %p91 = por %p89, %p90
      %p93 = scmp.ne.s32.totalorder %s76, %s92
      %p94 = scmp.eq.s32.totalorder %s21, 0
      %p95 = por %p93, %p94
      %p96 = scmp.le.s32.totalorder 1, %s15
      %p97 = scmp.lt.s32.totalorder %s15, 3
      %p98 = pnand %p96, %p97
      %p99 = pneg %p98
      // Predicated region
      $region9: #{tpu_custom_call.1} parent=5 // pred_check
        _
      $region10: #{tpu_custom_call.1} parent=5 // pred_check_branch
        %101 = sbr.rel (%p98) target = $region12
      $region11: #{tpu_custom_call.1} parent=5 // pred_region
        %s102 = ssub.s32 %s15, 1
        // Predicated region
        $region13: #{tpu_custom_call.1} parent=11 // pred_check
          %p103 = pneg %p36
        $region14: #{tpu_custom_call.1} parent=11 // pred_check_branch
          %105 = sbr.rel (%p103) target = $region16
        $region15: #{tpu_custom_call.1} parent=11 // pred_region
          %s107 = ssub.s32 16, 16
          %108 = vsyncadd [#allocation3], %s107
          %s110 = sshll.u32 [#allocation2], 4
          %s111 = int_to_ptr.vmem [resolvable:$true] %s110
          %113 = dma.hbm_to_vmem [thread:$0]  %s0, 16, %s111, [#allocation3]
        $region16: #{tpu_custom_call.1} parent=11 // pred_fallthru
          _
      $region12: #{tpu_custom_call.1} parent=5 // pred_fallthru
        _
      %p114 = scmp.lt.s32.totalorder %s15, 2
      // Predicated region
      $region17: #{tpu_custom_call.1} parent=5 // pred_check
        %p115 = pneg %p114
      $region18: #{tpu_custom_call.1} parent=5 // pred_check_branch
        %117 = sbr.rel (%p115) target = $region20
      $region19: #{tpu_custom_call.1} parent=5 // pred_region
        // Predicated region
        $region21: #{tpu_custom_call.1} parent=19 // pred_check
          %p118 = pneg %p56
        $region22: #{tpu_custom_call.1} parent=19 // pred_check_branch
          %120 = sbr.rel (%p118) target = $region24
        $region23: #{tpu_custom_call.1} parent=19 // pred_region
          %s121 = sand.u32 %s46, 1
          %s122 = scalar_lea.sflag [#allocation6], %s121
          %s123 = sand.u32 %s46, 1
          %s124 = smul.addr %s123, 8
          %s125 = scalar_lea.vmem [#allocation5], %s124
          %s127 = ssub.s32 128, 128
          %128 = vsyncadd %s122, %s127
          %s129 = smul.addr %s15, 128
          %s130 = scalar_lea.hbm %s1, %s129
          %s132 = sshll.u32 %s125, 4
          %s133 = int_to_ptr.vmem [resolvable:$true] %s132
          %135 = dma.hbm_to_vmem [thread:$0]  %s130, 128, %s133, %s122
        $region24: #{tpu_custom_call.1} parent=19 // pred_fallthru
          _
      $region20: #{tpu_custom_call.1} parent=5 // pred_fallthru
        _
      %p136 = scmp.le.s32.totalorder 1, %s15
      %p137 = scmp.lt.s32.totalorder %s15, 3
      %p138 = pnand %p136, %p137
      %p139 = pneg %p138
      // Predicated region
      $region25: #{tpu_custom_call.1} parent=5 // pred_check
        _
      $region26: #{tpu_custom_call.1} parent=5 // pred_check_branch
        %141 = sbr.rel (%p138) target = $region28
      $region27: #{tpu_custom_call.1} parent=5 // pred_region
        %s142 = ssub.s32 %s15, 1
        // Predicated region
        $region29: #{tpu_custom_call.1} parent=27 // pred_check
          %p143 = pneg %p36
        $region30: #{tpu_custom_call.1} parent=27 // pred_check_branch
          %145 = sbr.rel (%p143) target = $region32
        $region31: #{tpu_custom_call.1} parent=27 // pred_region
          %146 = dma.done [#allocation3], 16
        $region32: #{tpu_custom_call.1} parent=27 // pred_fallthru
          _
        %s147 = sand.u32 %s49, 1
        %s148 = scalar_lea.sflag [#allocation6], %s147
        %s149 = sand.u32 %s49, 1
        %s150 = smul.addr %s149, 8
        %s151 = scalar_lea.vmem [#allocation5], %s150
        // Predicated region
        $region33: #{tpu_custom_call.1} parent=27 // pred_check
          %p152 = pneg %p62
        $region34: #{tpu_custom_call.1} parent=27 // pred_check_branch
          %154 = sbr.rel (%p152) target = $region36
        $region35: #{tpu_custom_call.1} parent=27 // pred_region
          %155 = dma.done %s148, 128
        $region36: #{tpu_custom_call.1} parent=27 // pred_fallthru
          _
        %p156 = pneg %p36
        %p157 = pneg %p33
        %s158 = sand.u32 %s49, 1
        %s159 = scalar_lea.sflag [#allocation6], %s158
        %s160 = sand.u32 %s49, 1
        %s161 = smul.addr %s160, 8
        %s162 = scalar_lea.vmem [#allocation5], %s161
        %p163 = pneg %p62
        %p164 = pneg %p59
        %p165 = pneg %p88
        %p166 = pneg %p85
        %s167 = sand.u32 %s75, 1
        %s168 = scalar_lea.sflag [#allocation4], %s167
        %s169 = sand.u32 %s75, 1
        %s170 = smul.addr %s169, 8
        %s171 = scalar_lea.vmem [#allocation7], %s170
        %v172 = vld [vmem:[%s151] sm:$0xff]
        %v173 = vld [vmem:[#allocation2] sm:$0x1]
        %v174 = vlaneseq
        %v175 = vshrl.u32 %v174, 7
        %v176 = vsub.s32 0, %v175
        %v177 = vrot.slane %v173, %v176
        %vm178 = vcmp.lt.s32.totalorder %v177, 0
        %v179 = vadd.s32 %v177, 128
        %v180 = vsel %vm178, %v179, %v177
        %181 = vset.pattern.permute.xlu0 %v180
        %182 = vperm.xlu0 %181, %v172
        %v183 = vpop.permute.xlu0 %182
        %184 = vst [vmem:[%s171] sm:$0xff] %v183
        %s185 = sand.u32 %s75, 1
        %s186 = scalar_lea.sflag [#allocation4], %s185
        %s187 = sand.u32 %s75, 1
        %s188 = smul.addr %s187, 8
        %s189 = scalar_lea.vmem [#allocation7], %s188
        // Predicated region
        $region37: #{tpu_custom_call.1} parent=27 // pred_check
          %p190 = pneg %p85
        $region38: #{tpu_custom_call.1} parent=27 // pred_check_branch
          %192 = sbr.rel (%p190) target = $region40
        $region39: #{tpu_custom_call.1} parent=27 // pred_region
          %s194 = ssub.s32 128, 128
          %195 = vsyncadd %s186, %s194
          %s196 = smul.addr %s20, 128
          %s197 = scalar_lea.hbm %s2, %s196
          %s199 = sshll.u32 %s189, 4
          %s200 = int_to_ptr.vmem [resolvable:$true] %s199
          %202 = dma.vmem_to_hbm [thread:$0]  %s200, 128, %s197, %s186
        $region40: #{tpu_custom_call.1} parent=27 // pred_fallthru
          _
      $region28: #{tpu_custom_call.1} parent=5 // pred_fallthru
        _
      %p203 = scmp.le.s32.totalorder 2, %s15
      // Predicated region
      $region41: #{tpu_custom_call.1} parent=5 // pred_check
        %p204 = pneg %p203
      $region42: #{tpu_custom_call.1} parent=5 // pred_check_branch
        %206 = sbr.rel (%p204) target = $region44
      $region43: #{tpu_custom_call.1} parent=5 // pred_region
        %s207 = ssub.s32 %s15, 2
        // Predicated region
        $region45: #{tpu_custom_call.1} parent=43 // pred_check
          %p208 = pneg %p91
        $region46: #{tpu_custom_call.1} parent=43 // pred_check_branch
          %210 = sbr.rel (%p208) target = $region48
        $region47: #{tpu_custom_call.1} parent=43 // pred_region
          %s211 = sand.u32 %s76, 1
          %s212 = scalar_lea.sflag [#allocation4], %s211
          %s213 = sand.u32 %s76, 1
          %s214 = smul.addr %s213, 8
          %s215 = scalar_lea.vmem [#allocation7], %s214
          %216 = dma.done %s212, 128
        $region48: #{tpu_custom_call.1} parent=43 // pred_fallthru
          _
      $region44: #{tpu_custom_call.1} parent=5 // pred_fallthru
        _
    $region6: #{tpu_custom_call.1} parent=1 // loop_footer
      %s19 = sadd.s32 1, %s15
    $region7: #{tpu_custom_call.1} parent=1 // loop_footer_branch
      %14 = sbr.rel target = $region3
    $region8: #{tpu_custom_call.1} parent=1 // loop_exit
      _
    %217 = vsyncpa [#allocation3], 1
    %s218 = scalar_lea.sflag [#allocation3], 1
    %219 = vsyncpa %s218, 1
    %220 = vsyncpa [#allocation6], 1
    %s221 = scalar_lea.sflag [#allocation6], 1
    %222 = vsyncpa %s221, 1
    %223 = vsyncpa [#allocation4], 1
    %s224 = scalar_lea.sflag [#allocation4], 1
    %225 = vsyncpa %s224, 1

// kernel: tpu_custom_call.1
$region0: #{tpu_custom_call.1}
  #allocation0 [shape = 'u32[]', space=smem, size = 0x4, offset = 0x4, fixed_abs, tag = 'smem constant byte address 0x4 - core index']
  #allocation1 [shape = 'u32[144,128]{1,0:T(1,128)}', space=vmem, size = 0x12000, scoped, tag = 'internal scratch']
  %s0 = inlined_call_operand.hbm [shape: f32[16,128], index: 0, kind: input, shape index: {}]
  %s1 = inlined_call_operand.hbm [shape: bf16[128,128], index: 1, kind: input, shape index: {}]
  %s2 = inlined_call_operand.hbm [shape: f32[16,128], index: 2, kind: output, shape index: {}]
  %s3 = sld [smem:[#allocation0]]
  $region49: #{tpu_custom_call.1} parent=0
    _
  %s5 = ssub.s32 1, %s3
  %s6 = scalar_select 0, %s5, %s3
  $region1: #{tpu_custom_call.1} parent=0
    #allocation2 [shape = 'u8[8192]{0}', space=vmem, size = 0x2000, scoped, tag = 'input window, operand 0']
    #allocation3 [shape = 's32[2]{0}', space=sflag, size = 0x8, scoped, tag = 'scoped memory for tpu_custom_call.1']
    #allocation4 [shape = 's32[2]{0}', space=sflag, size = 0x8, scoped, tag = 'scoped memory for tpu_custom_call.1']
    #allocation5 [shape = 'u8[32768]{0}', space=vmem, size = 0x8000, scoped, tag = 'input window, operand 1, single buffered']
    #allocation6 [shape = 's32[1]{0}', space=sflag, size = 0x4, scoped, tag = 'scoped memory for tpu_custom_call.1']
    #allocation7 [shape = 'u8[8192]{0}', space=vmem, size = 0x2000, scoped, tag = 'output window, operand 0']
    %7 = vsyncpa [#allocation3], 0
    %s8 = scalar_lea.sflag [#allocation3], 1
    %9 = vsyncpa %s8, 0
    %10 = vsyncpa [#allocation6], 0
    %11 = vsyncpa [#allocation4], 0
    %s12 = scalar_lea.sflag [#allocation4], 1
    %13 = vsyncpa %s12, 0
    loop: start=0, step=1, limit=4
    $region2: #{tpu_custom_call.1} parent=1 // loop_pre_header
      _
    $region3: #{tpu_custom_call.1} parent=1 // loop_header
      %s15 = sphi 0, %s19
      %p16 = scmp.ge.s32.totalorder %s15, 4
      %s25 = sphi 0, %s27
      %s28 = sphi 0, %s25
      %s29 = sphi 0, %s28
      %s45 = sphi 0, %s29
      %s49 = sphi 0, %s49
      %s51 = sphi 0, %s49
      %s52 = sphi 0, %s51
      %s66 = sphi 0, %s52
      %s72 = sphi 0, %s74
      %s75 = sphi 0, %s72
      %s76 = sphi 0, %s75
      %s92 = sphi 0, %s76
    $region4: #{tpu_custom_call.1} parent=1 // loop_header_branch
      %18 = sbr.rel (%p16) target = $region8
    $region5: #{tpu_custom_call.1} parent=1 // loop_body
      %s20 = ssub.s32 %s15, 1
      %s21 = ssub.s32 %s15, 2
      %s22 = sadd.s32 %s15, 1
      %s23 = ssub.s32 %s15, %s22
      %p24 = scmp.eq.s32.totalorder %s23, 0
      %s26 = sadd.s32 %s25, 1
      %s27 = scalar_select %p24, %s25, %s26
      %p30 = pneg %p24
      %p31 = scmp.eq.s32.totalorder %s15, 1
      %p32 = por %p30, %p31
      %p33 = scmp.ne.s32.totalorder %s25, %s28
      %p34 = scmp.eq.s32.totalorder %s15, 0
      %p35 = por %p33, %p34
      %p36 = scmp.ne.s32.totalorder %s25, %s28
      %p37 = scmp.eq.s32.totalorder %s20, 1
      %p38 = por %p36, %p37
      %p39 = scmp.ne.s32.totalorder %s28, %s29
      %p40 = scmp.eq.s32.totalorder %s20, 0
      %p41 = por %p39, %p40
      %p42 = scmp.ne.s32.totalorder %s28, %s29
      %p43 = scmp.eq.s32.totalorder %s21, 1
      %p44 = por %p42, %p43
      %p46 = scmp.ne.s32.totalorder %s29, %s45
      %p47 = scmp.eq.s32.totalorder %s21, 0
      %p48 = por %p46, %p47
      %s50 = sadd.s32 %s49, 1
      %p53 = scmp.eq.s32.totalorder %s15, 1
      %p54 = scmp.ne.s32.totalorder %s49, %s51
      %p55 = scmp.eq.s32.totalorder %s15, 0
      %p56 = por %p54, %p55
      %p57 = scmp.ne.s32.totalorder %s49, %s51
      %p58 = scmp.eq.s32.totalorder %s20, 1
      %p59 = por %p57, %p58
      %p60 = scmp.ne.s32.totalorder %s51, %s52
      %p61 = scmp.eq.s32.totalorder %s20, 0
      %p62 = por %p60, %p61
      %p63 = scmp.ne.s32.totalorder %s51, %s52
      %p64 = scmp.eq.s32.totalorder %s21, 1
      %p65 = por %p63, %p64
      %p67 = scmp.ne.s32.totalorder %s52, %s66
      %p68 = scmp.eq.s32.totalorder %s21, 0
      %p69 = por %p67, %p68
      %s70 = ssub.s32 %s15, %s22
      %p71 = scmp.eq.s32.totalorder %s70, 0
      %s73 = sadd.s32 %s72, 1
      %s74 = scalar_select %p71, %s72, %s73
      %p77 = pneg %p71
      %p78 = scmp.eq.s32.totalorder %s15, 1
      %p79 = por %p77, %p78
      %p80 = scmp.ne.s32.totalorder %s72, %s75
      %p81 = scmp.eq.s32.totalorder %s15, 0
      %p82 = por %p80, %p81
      %p83 = scmp.ne.s32.totalorder %s72, %s75
      %p84 = scmp.eq.s32.totalorder %s20, 1
      %p85 = por %p83, %p84
      %p86 = scmp.ne.s32.totalorder %s75, %s76
      %p87 = scmp.eq.s32.totalorder %s20, 0
      %p88 = por %p86, %p87
      %p89 = scmp.ne.s32.totalorder %s75, %s76
      %p90 = scmp.eq.s32.totalorder %s21, 1
      %p91 = por %p89, %p90
      %p93 = scmp.ne.s32.totalorder %s76, %s92
      %p94 = scmp.eq.s32.totalorder %s21, 0
      %p95 = por %p93, %p94
      %p96 = scmp.le.s32.totalorder 1, %s15
      %p97 = scmp.lt.s32.totalorder %s15, 3
      %p98 = pnand %p96, %p97
      %p99 = pneg %p98
      // Predicated region
      $region9: #{tpu_custom_call.1} parent=5 // pred_check
        _
      $region10: #{tpu_custom_call.1} parent=5 // pred_check_branch
        %101 = sbr.rel (%p98) target = $region12
      $region11: #{tpu_custom_call.1} parent=5 // pred_region
        %s102 = ssub.s32 %s15, 1
        // Predicated region
        $region13: #{tpu_custom_call.1} parent=11 // pred_check
          %p103 = pneg %p62
        $region14: #{tpu_custom_call.1} parent=11 // pred_check_branch
          %105 = sbr.rel (%p103) target = $region16
        $region15: #{tpu_custom_call.1} parent=11 // pred_region
          %s107 = ssub.s32 1024, 1024
          %108 = vsyncadd [#allocation6], %s107
          %s109 = sshll.u32 [#allocation5], 4
          %s110 = int_to_ptr.vmem [resolvable:$true] %s109
          %115 = dma.hbm_to_vmem [thread:$0]  %s1, 1024, %s110, [#allocation6], 64, 64, 4
        $region16: #{tpu_custom_call.1} parent=11 // pred_fallthru
          _
      $region12: #{tpu_custom_call.1} parent=5 // pred_fallthru
        _
      %p116 = scmp.lt.s32.totalorder %s15, 2
      // Predicated region
      $region17: #{tpu_custom_call.1} parent=5 // pred_check
        %p117 = pneg %p116
      $region18: #{tpu_custom_call.1} parent=5 // pred_check_branch
        %119 = sbr.rel (%p117) target = $region20
      $region19: #{tpu_custom_call.1} parent=5 // pred_region
        // Predicated region
        $region21: #{tpu_custom_call.1} parent=19 // pred_check
          %p120 = pneg %p35
        $region22: #{tpu_custom_call.1} parent=19 // pred_check_branch
          %122 = sbr.rel (%p120) target = $region24
        $region23: #{tpu_custom_call.1} parent=19 // pred_region
          %s123 = sand.u32 %s25, 1
          %s124 = scalar_lea.sflag [#allocation3], %s123
          %s125 = sand.u32 %s25, 1
          %s126 = smul.addr %s125, 8
          %s127 = scalar_lea.vmem [#allocation2], %s126
          %s129 = ssub.s32 128, 128
          %130 = vsyncadd %s124, %s129
          %s131 = smul.addr %s15, 128
          %s132 = scalar_lea.hbm %s0, %s131
          %s134 = sshll.u32 %s127, 4
          %s135 = int_to_ptr.vmem [resolvable:$true] %s134
          %137 = dma.hbm_to_vmem [thread:$0]  %s132, 128, %s135, %s124
        $region24: #{tpu_custom_call.1} parent=19 // pred_fallthru
          _
      $region20: #{tpu_custom_call.1} parent=5 // pred_fallthru
        _
      %p138 = scmp.le.s32.totalorder 1, %s15
      %p139 = scmp.lt.s32.totalorder %s15, 3
      %p140 = pnand %p138, %p139
      %p141 = pneg %p140
      // Predicated region
      $region25: #{tpu_custom_call.1} parent=5 // pred_check
        _
      $region26: #{tpu_custom_call.1} parent=5 // pred_check_branch
        %143 = sbr.rel (%p140) target = $region28
      $region27: #{tpu_custom_call.1} parent=5 // pred_region
        %s144 = ssub.s32 %s15, 1
        %s145 = sand.u32 %s28, 1
        %s146 = scalar_lea.sflag [#allocation3], %s145
        %s147 = sand.u32 %s28, 1
        %s148 = smul.addr %s147, 8
        %s149 = scalar_lea.vmem [#allocation2], %s148
        // Predicated region
        $region29: #{tpu_custom_call.1} parent=27 // pred_check
          %p150 = pneg %p41
        $region30: #{tpu_custom_call.1} parent=27 // pred_check_branch
          %152 = sbr.rel (%p150) target = $region32
        $region31: #{tpu_custom_call.1} parent=27 // pred_region
          %153 = dma.done %s146, 128
        $region32: #{tpu_custom_call.1} parent=27 // pred_fallthru
          _
        // Predicated region
        $region33: #{tpu_custom_call.1} parent=27 // pred_check
          %p154 = pneg %p62
        $region34: #{tpu_custom_call.1} parent=27 // pred_check_branch
          %156 = sbr.rel (%p154) target = $region36
        $region35: #{tpu_custom_call.1} parent=27 // pred_region
          %157 = dma.done [#allocation6], 1024
        $region36: #{tpu_custom_call.1} parent=27 // pred_fallthru
          _
        %s158 = sand.u32 %s28, 1
        %s159 = scalar_lea.sflag [#allocation3], %s158
        %s160 = sand.u32 %s28, 1
        %s161 = smul.addr %s160, 8
        %s162 = scalar_lea.vmem [#allocation2], %s161
        %p163 = pneg %p41
        %p164 = pneg %p38
        %p165 = pneg %p62
        %p166 = pneg %p59
        %p167 = pneg %p88
        %p168 = pneg %p85
        %s169 = sand.u32 %s75, 1
        %s170 = scalar_lea.sflag [#allocation4], %s169
        %s171 = sand.u32 %s75, 1
        %s172 = smul.addr %s171, 8
        %s173 = scalar_lea.vmem [#allocation7], %s172
        %v174 = vld [vmem:[#allocation5] sm:$0xf]
        %v175 = vld [vmem:[#allocation5 + $0x4] sm:$0xf]
        %v176 = vld [vmem:[#allocation5 + $0x8] sm:$0xf]
        %v177 = vld [vmem:[#allocation5 + $0xc] sm:$0xf]
        %v178 = vld [vmem:[#allocation5 + $0x10] sm:$0xf]
        %v179 = vld [vmem:[#allocation5 + $0x14] sm:$0xf]
        %v180 = vld [vmem:[#allocation5 + $0x18] sm:$0xf]
        %v181 = vld [vmem:[#allocation5 + $0x1c] sm:$0xf]
        %v182 = vld [vmem:[#allocation5 + $0x20] sm:$0xf]
        %v183 = vld [vmem:[#allocation5 + $0x24] sm:$0xf]
        %v184 = vld [vmem:[#allocation5 + $0x28] sm:$0xf]
        %v185 = vld [vmem:[#allocation5 + $0x2c] sm:$0xf]
        %v186 = vld [vmem:[#allocation5 + $0x30] sm:$0xf]
        %v187 = vld [vmem:[#allocation5 + $0x34] sm:$0xf]
        %v188 = vld [vmem:[#allocation5 + $0x38] sm:$0xf]
        %v189 = vld [vmem:[#allocation5 + $0x3c] sm:$0xf]
        %v190 = vunpack.c.l.bf16 %v174
        %v191 = vunpack.c.l.bf16 %v175
        %v192 = vunpack.c.l.bf16 %v176
        %v193 = vunpack.c.l.bf16 %v177
        %v194 = vunpack.c.l.bf16 %v178
        %v195 = vunpack.c.l.bf16 %v179
        %v196 = vunpack.c.l.bf16 %v180
        %v197 = vunpack.c.l.bf16 %v181
        %v198 = vunpack.c.l.bf16 %v182
        %v199 = vunpack.c.l.bf16 %v183
        %v200 = vunpack.c.l.bf16 %v184
        %v201 = vunpack.c.l.bf16 %v185
        %v202 = vunpack.c.l.bf16 %v186
        %v203 = vunpack.c.l.bf16 %v187
        %v204 = vunpack.c.l.bf16 %v188
        %v205 = vunpack.c.l.bf16 %v189
        %v206 = vld [vmem:[%s149] sm:$0xff]
        %207 = vmatprep.subr.mxu0 0.0
        %208 = vmatpush1.msra.mxu0 %v205
        %209 = vmatprep.subr.mxu0 0.0
        %210 = vmatpush1.msra.mxu0 %v204
        %211 = vmatprep.subr.mxu0 0.0
        %212 = vmatpush1.msra.mxu0 %v203
        %213 = vmatprep.subr.mxu0 0.0
        %214 = vmatpush1.msra.mxu0 %v202
        %215 = vmatprep.subr.mxu0 0.0
        %216 = vmatpush1.msra.mxu0 %v201
        %217 = vmatprep.subr.mxu0 0.0
        %218 = vmatpush1.msra.mxu0 %v200
        %219 = vmatprep.subr.mxu0 0.0
        %220 = vmatpush1.msra.mxu0 %v199
        %221 = vmatprep.subr.mxu0 0.0
        %222 = vmatpush1.msra.mxu0 %v198
        %223 = vmatprep.subr.mxu0 0.0
        %224 = vmatpush1.msra.mxu0 %v197
        %225 = vmatprep.subr.mxu0 0.0
        %226 = vmatpush1.msra.mxu0 %v196
        %227 = vmatprep.subr.mxu0 0.0
        %228 = vmatpush1.msra.mxu0 %v195
        %229 = vmatprep.subr.mxu0 0.0
        %230 = vmatpush1.msra.mxu0 %v194
        %231 = vmatprep.subr.mxu0 0.0
        %232 = vmatpush1.msra.mxu0 %v193
        %233 = vmatprep.subr.mxu0 0.0
        %234 = vmatpush1.msra.mxu0 %v192
        %235 = vmatprep.subr.mxu0 0.0
        %236 = vmatpush1.msra.mxu0 %v191
        %237 = vmatprep.subr.mxu0 0.0
        %238 = vmatpush1.msra.mxu0 %v190
        %239 = vmatprep.subr.mxu0 0.0
        %240 = vmatpush2.msra.mxu0 0.0
        %241 = vmatprep.subr.mxu0 0.0
        %242 = vmatpush2.msra.mxu0 0.0
        %243 = vmatprep.subr.mxu0 0.0
        %244 = vmatpush2.msra.mxu0 0.0
        %245 = vmatprep.subr.mxu0 0.0
        %246 = vmatpush2.msra.mxu0 0.0
        %247 = vmatprep.subr.mxu0 0.0
        %248 = vmatpush2.msra.mxu0 0.0
        %249 = vmatprep.subr.mxu0 0.0
        %250 = vmatpush2.msra.mxu0 0.0
        %251 = vmatprep.subr.mxu0 0.0
        %252 = vmatpush2.msra.mxu0 0.0
        %253 = vmatprep.subr.mxu0 0.0
        %254 = vmatpush2.msra.mxu0 0.0
        %255 = vmatprep.subr.mxu0 0.0
        %256 = vmatpush2.msra.mxu0 0.0
        %257 = vmatprep.subr.mxu0 0.0
        %258 = vmatpush2.msra.mxu0 0.0
        %259 = vmatprep.subr.mxu0 0.0
        %260 = vmatpush2.msra.mxu0 0.0
        %261 = vmatprep.subr.mxu0 0.0
        %262 = vmatpush2.msra.mxu0 0.0
        %263 = vmatprep.subr.mxu0 0.0
        %264 = vmatpush2.msra.mxu0 0.0
        %265 = vmatprep.subr.mxu0 0.0
        %266 = vmatpush2.msra.mxu0 0.0
        %267 = vmatprep.subr.mxu0 0.0
        %268 = vmatpush2.msra.mxu0 0.0
        %269 = vmatprep.subr.mxu0 0.0
        %270 = vmatpush2.msra.mxu0 0.0
        %271 = vmatprep.mubr.f32.mxu0 0.0
        %272 = vmatmul.mubr.f32.gmra.mxu0 %v206
        %v273 = vpop.f32.mrf.mxu0
        %v274 = vadd.f32 0.0, %v273
        %v275 = vpop.f32.mrf.mxu0
        %276 = vdwg.mxu0
        %277 = vst [vmem:[%s173] sm:$0xff] %v274
        %s278 = sand.u32 %s75, 1
        %s279 = scalar_lea.sflag [#allocation4], %s278
        %s280 = sand.u32 %s75, 1
        %s281 = smul.addr %s280, 8
        %s282 = scalar_lea.vmem [#allocation7], %s281
        // Predicated region
        $region37: #{tpu_custom_call.1} parent=27 // pred_check
          %p283 = pneg %p85
        $region38: #{tpu_custom_call.1} parent=27 // pred_check_branch
          %285 = sbr.rel (%p283) target = $region40
        $region39: #{tpu_custom_call.1} parent=27 // pred_region
          %s287 = ssub.s32 128, 128
          %288 = vsyncadd %s279, %s287
          %s289 = smul.addr %s20, 128
          %s290 = scalar_lea.hbm %s2, %s289
          %s292 = sshll.u32 %s282, 4
          %s293 = int_to_ptr.vmem [resolvable:$true] %s292
          %295 = dma.vmem_to_hbm [thread:$0]  %s293, 128, %s290, %s279
        $region40: #{tpu_custom_call.1} parent=27 // pred_fallthru
          _
      $region28: #{tpu_custom_call.1} parent=5 // pred_fallthru
        _
      %p296 = scmp.le.s32.totalorder 2, %s15
      // Predicated region
      $region41: #{tpu_custom_call.1} parent=5 // pred_check
        %p297 = pneg %p296
      $region42: #{tpu_custom_call.1} parent=5 // pred_check_branch
        %299 = sbr.rel (%p297) target = $region44
      $region43: #{tpu_custom_call.1} parent=5 // pred_region
        %s300 = ssub.s32 %s15, 2
        // Predicated region
        $region45: #{tpu_custom_call.1} parent=43 // pred_check
          %p301 = pneg %p91
        $region46: #{tpu_custom_call.1} parent=43 // pred_check_branch
          %303 = sbr.rel (%p301) target = $region48
        $region47: #{tpu_custom_call.1} parent=43 // pred_region
          %s304 = sand.u32 %s76, 1
          %s305 = scalar_lea.sflag [#allocation4], %s304
          %s306 = sand.u32 %s76, 1
          %s307 = smul.addr %s306, 8
          %s308 = scalar_lea.vmem [#allocation7], %s307
          %309 = dma.done %s305, 128
        $region48: #{tpu_custom_call.1} parent=43 // pred_fallthru
          _
      $region44: #{tpu_custom_call.1} parent=5 // pred_fallthru
        _
    $region6: #{tpu_custom_call.1} parent=1 // loop_footer
      %s19 = sadd.s32 1, %s15
    $region7: #{tpu_custom_call.1} parent=1 // loop_footer_branch
      %14 = sbr.rel target = $region3
    $region8: #{tpu_custom_call.1} parent=1 // loop_exit
      _
    %310 = vsyncpa [#allocation3], 1
    %s311 = scalar_lea.sflag [#allocation3], 1
    %312 = vsyncpa %s311, 1
    %313 = vsyncpa [#allocation6], 1
    %314 = vsyncpa [#allocation4], 1
    %s315 = scalar_lea.sflag [#allocation4], 1
    %316 = vsyncpa %s315, 1

</llo_original>
